<compile_context>
chip_gen: v6e
topology: v6e:2x2x1
jax: 0.10.0
libtpu: 0.0.40
codegen_flags: <defaults>
</compile_context>

<pallas_src>
import functools

import jax
import jax.numpy as jnp
from jax import lax
from jax.experimental import pallas as pl
from jax.experimental.pallas import tpu as pltpu


_EPS = 1e-12                                # F.normalize eps
_LOGITS_TEMP_BUDGET = 12 * 1024 * 1024      # budget for f32 logits/exp temporaries


def _vmem_limit_bytes():
    """Generation-aware scoped-VMEM limit (headroom on 64 MiB v7x parts)."""
    try:
        cap = getattr(pltpu.get_tpu_info(), "vmem_capacity_bytes", None)
    except Exception:
        cap = None
    if not cap:
        cap = 128 * 1024 * 1024
    return int(min(int(cap) * 5 // 8, 64 * 1024 * 1024))


def _pick_cl_tiling(b, row_tile=None):
    """Row tile bounded by the (3 * TB * B * 4 B) logits/exp temp budget."""
    if row_tile is not None and b % row_tile == 0 and (row_tile == b or row_tile % 8 == 0):
        tb = row_tile
    else:
        cap = max(8, _LOGITS_TEMP_BUDGET // (3 * 4 * b))
        tb = None
        for cand in (512, 256, 128, 64, 32, 16, 8):
            if cand <= cap and b % cand == 0:
                tb = cand
                break
        if tb is None:
            # TODO(synk): batches not divisible by 8 fall back to one resident
            # tile; very large such batches would need padding + masking.
            tb = b
    n_tiles = b // tb
    n_splits = 2 if (n_tiles >= 2 and n_tiles % 2 == 0) else 1
    return tb, n_tiles // n_splits, n_splits


def _pick_mse_tile(b):
    for cand in (1024, 512, 256, 128, 64, 32, 16, 8):
        if b % cand == 0:
            return cand
    return b


# --------------------------------------------------------------------------
# contrastive (+ optional fused MSE) kernel
# --------------------------------------------------------------------------
def _cl_kernel(tiles_per_split, has_mse, *refs):
    """Grid point (c, j) processes row tile (c*tiles_per_split + j) of size TB.

    refs = inv_temp(SMEM (1,)), student tile (TB,D), normalized-teacher HBM,
           [raw teacher tile (TB,D)], outputs([sq], rowce, diag, colm, coll),
           scratch(t_n_vmem (B,D) bf16)
    """
    inv_temp_ref, s_ref, t_n_hbm = refs[0], refs[1], refs[2]
    k = 3
    if has_mse:
        t_raw_ref = refs[k]; k += 1
        sq_ref = refs[k]; k += 1
    rowce_ref, diag_ref, colm_ref, coll_ref, t_n_vmem = refs[k:]

    c = pl.program_id(0)
    j = pl.program_id(1)
    b, _ = t_n_vmem.shape
    tb = s_ref.shape[0]

    @pl.when(j == 0)
    def _init():
        # Teacher was normalized once in the wrapper; fetch the bf16 copy once
        # per core/split (single buffer -- no pipelined double-buffering).
        pltpu.sync_copy(t_n_hbm, t_n_vmem)
        if has_mse:
            sq_ref[...] = jnp.zeros_like(sq_ref)
        rowce_ref[...] = jnp.zeros_like(rowce_ref)
        diag_ref[...] = jnp.zeros_like(diag_ref)
        colm_ref[...] = jnp.full_like(colm_ref, -jnp.inf)
        coll_ref[...] = jnp.zeros_like(coll_ref)

    inv_temp = inv_temp_ref[0]                       # scalar f32 from SMEM

    s = s_ref[...].astype(jnp.float32)               # (TB, D)

    if has_mse:
        diff = s - t_raw_ref[...].astype(jnp.float32)
        sq_ref[...] += jnp.sum(diff * diff)

    # F.normalize: x * rsqrt(max(||x||^2, eps^2)) -- rsqrt runs on the EUP.
    eps2 = jnp.float32(_EPS * _EPS)
    s_n = s * lax.rsqrt(jnp.maximum(jnp.sum(s * s, axis=-1, keepdims=True), eps2))

    # matching pre-normalized teacher rows from the resident bf16 copy
    row0 = pl.multiple_of((c * tiles_per_split + j) * tb, tb)
    t_n_rows = t_n_vmem[pl.ds(row0, tb), :].astype(jnp.float32)

    # diagonal logits (1/temp applied post-product, kept in f32)
    diag = inv_temp * jnp.sum(s_n * t_n_rows, axis=-1, keepdims=True)   # (TB,1)
    diag_ref[...] += jnp.sum(diag)

    # logits tile: bf16 MXU inputs, f32 accumulation, post-matmul 1/temp scale
    logits = inv_temp * lax.dot_general(
        s_n.astype(jnp.bfloat16), t_n_vmem[...],
        dimension_numbers=(((1,), (1,)), ((), ())),
        preferred_element_type=jnp.float32)                             # (TB,B)

    # row-wise cross-entropy contribution (each row sees all B columns)
    m_r = jnp.max(logits, axis=1, keepdims=True)
    lse_r = jnp.log(jnp.sum(jnp.exp(logits - m_r), axis=1, keepdims=True)) + m_r
    rowce_ref[...] += jnp.sum(lse_r - diag)

    # per-split online column logsumexp stats (combined across splits in JAX)
    colm = colm_ref[...].reshape(1, b)
    coll = coll_ref[...].reshape(1, b)
    m_tile = jnp.max(logits, axis=0, keepdims=True)                     # (1,B)
    m_new = jnp.maximum(colm, m_tile)
    coll_new = (coll * jnp.exp(colm - m_new)
                + jnp.sum(jnp.exp(logits - m_new), axis=0, keepdims=True))
    colm_ref[...] = m_new.reshape(1, 1, b)
    coll_ref[...] = coll_new.reshape(1, 1, b)


@functools.partial(jax.jit, static_argnames=("has_mse", "tb", "tiles_per_split",
                                              "n_splits", "vmem_limit"))
def _cl_call(inv_temp, student, teacher, *, has_mse, tb, tiles_per_split,
             n_splits, vmem_limit):
    b, d = student.shape

    # normalize the teacher ONCE in the wrapper; bf16 is the MXU input dtype
    t32 = teacher.astype(jnp.float32)
    t_n = (t32 * lax.rsqrt(jnp.maximum(jnp.sum(t32 * t32, axis=-1, keepdims=True),
                                       jnp.float32(_EPS * _EPS)))
           ).astype(jnp.bfloat16)

    kernel = functools.partial(_cl_kernel, tiles_per_split, has_mse)

    row_map = lambda c, j: (c * tiles_per_split + j, 0)
    part_map = lambda c, j: (c, 0, 0)

    in_specs = [
        pl.BlockSpec(memory_space=pltpu.MemorySpace.SMEM),   # 1/temp scalar
        pl.BlockSpec((tb, d), row_map),                      # student row tile
        pl.BlockSpec(memory_space=pl.ANY),                   # normalized teacher (HBM)
    ]
    operands = [inv_temp, student, t_n]
    if has_mse:
        in_specs.append(pl.BlockSpec((tb, d), row_map))      # raw teacher tile
        operands.append(teacher)

    out_shapes, out_specs = [], []
    if has_mse:
        out_shapes.append(jax.ShapeDtypeStruct((n_splits, 1, 1), jnp.float32))
        out_specs.append(pl.BlockSpec((1, 1, 1), part_map))
    out_shapes += [
        jax.ShapeDtypeStruct((n_splits, 1, 1), jnp.float32),  # sum(lse_row - diag)
        jax.ShapeDtypeStruct((n_splits, 1, 1), jnp.float32),  # sum(diag)
        jax.ShapeDtypeStruct((n_splits, 1, b), jnp.float32),  # per-column running max
        jax.ShapeDtypeStruct((n_splits, 1, b), jnp.float32),  # per-column running sum-exp
    ]
    out_specs += [
        pl.BlockSpec((1, 1, 1), part_map),
        pl.BlockSpec((1, 1, 1), part_map),
        pl.BlockSpec((1, 1, b), part_map),
        pl.BlockSpec((1, 1, b), part_map),
    ]

    itemsize = jnp.dtype(student.dtype).itemsize
    cost = pl.CostEstimate(
        flops=int(2 * b * b * d + 10 * b * d),
        transcendentals=int(2 * b * b + 4 * b),
        bytes_accessed=int(student.size * itemsize
                           + (teacher.size * itemsize if has_mse else 0)
                           + t_n.size * 2 * max(1, n_splits)),
    )

    outs = pl.pallas_call(
        kernel,
        out_shape=tuple(out_shapes),
        grid_spec=pltpu.PrefetchScalarGridSpec(
            num_scalar_prefetch=0,
            grid=(n_splits, tiles_per_split),
            in_specs=in_specs,
            out_specs=tuple(out_specs),
            scratch_shapes=[pltpu.VMEM((b, d), jnp.bfloat16)],  # resident teacher
        ),
        compiler_params=pltpu.CompilerParams(
            dimension_semantics=("parallel", "arbitrary"),   # split rows across TCs (v7x)
            vmem_limit_bytes=vmem_limit,
        ),
        cost_estimate=cost,
    )(*operands)

    if has_mse:
        sq_p, rowce_p, diag_p, colm_p, coll_p = outs
        mse = jnp.sum(sq_p) / jnp.float32(b * d)
    else:
        rowce_p, diag_p, colm_p, coll_p = outs
        mse = jnp.float32(0.0)

    # tiny epilogue: combine per-split partials (plain JAX)
    nb = jnp.float32(b)
    m_all = jnp.max(colm_p, axis=0)                              # (1, B)
    l_all = jnp.sum(coll_p * jnp.exp(colm_p - m_all), axis=0)    # (1, B)
    lse_c = jnp.log(l_all) + m_all
    loss_s2t = jnp.sum(rowce_p) / nb
    loss_t2s = (jnp.sum(lse_c) - jnp.sum(diag_p)) / nb
    cl = 0.5 * (loss_s2t + loss_t2s)
    return mse, cl


# --------------------------------------------------------------------------
# MSE-only specialization: trivially mem-bound streaming reduction
# --------------------------------------------------------------------------
def _mse_kernel(s_ref, t_ref, out_ref):
    @pl.when(pl.program_id(0) == 0)
    def _init():
        out_ref[...] = jnp.zeros_like(out_ref)
    diff = s_ref[...].astype(jnp.float32) - t_ref[...].astype(jnp.float32)
    out_ref[...] += jnp.sum(diff * diff)


@functools.partial(jax.jit, static_argnames=("tb", "vmem_limit"))
def _mse_call(student, teacher, *, tb, vmem_limit):
    b, d = student.shape
    out = pl.pallas_call(
        _mse_kernel,
        out_shape=jax.ShapeDtypeStruct((1, 1), jnp.float32),
        grid_spec=pltpu.PrefetchScalarGridSpec(
            num_scalar_prefetch=0,
            grid=(b // tb,),
            in_specs=[pl.BlockSpec((tb, d), lambda i: (i, 0)),
                      pl.BlockSpec((tb, d), lambda i: (i, 0))],
            out_specs=pl.BlockSpec((1, 1), lambda i: (0, 0)),
        ),
        compiler_params=pltpu.CompilerParams(
            dimension_semantics=("arbitrary",),
            vmem_limit_bytes=vmem_limit,
        ),
    )(student, teacher)
    return out[0, 0] / jnp.float32(b * d)


# --------------------------------------------------------------------------
# module wrapper
# --------------------------------------------------------------------------
class LossManagerPallas:
    """JAX/Pallas re-implementation of LossManager.forward loss math.

    The wrapped sentence-transformer `Framework` is external; its outputs
    (sentence_embedding + optional scalar decoding losses) are the inputs.
    """

    def __init__(self, loss_mse_scale=1.0, loss_at_teacher_scale=0.0,
                 loss_at_student_scale=0.0, loss_contrastive_scale=0.0,
                 row_tile=None):
        self.loss_mse_scale = loss_mse_scale
        self.loss_at_teacher_scale = loss_at_teacher_scale
        self.loss_at_student_scale = loss_at_student_scale
        self.loss_contrastive_scale = loss_contrastive_scale
        self.row_tile = row_tile
        if loss_contrastive_scale > 0:
            # nn.Parameter(torch.ones([]) * 0.07) -- deterministic init
            self.temp = jnp.array(0.07, dtype=jnp.float32)
        # TODO(synk): no custom_vjp is defined -- forward/eval only; gradients
        # do not flow to the embeddings or the temperature parameter.

    def forward(self, outputs, labels):
        student = outputs['sentence_embedding']
        b, d = student.shape
        vmem_limit = _vmem_limit_bytes()

        mse = None
        cl = None
        if self.loss_contrastive_scale > 0:
            # mirrors PyTorch's in-place `self.temp.clamp_(0.001, 0.5)`;
            # clip + reciprocal hoisted out of the kernel, scalar lives in SMEM.
            self.temp = jnp.clip(self.temp, 0.001, 0.5)
            inv_temp = (1.0 / self.temp).reshape(1).astype(jnp.float32)
            tb, tiles_per_split, n_splits = _pick_cl_tiling(b, self.row_tile)
            mse, cl = _cl_call(inv_temp, student, labels,
                               has_mse=self.loss_mse_scale > 0,
                               tb=tb, tiles_per_split=tiles_per_split,
                               n_splits=n_splits, vmem_limit=vmem_limit)
        elif self.loss_mse_scale > 0:
            mse = _mse_call(student, labels, tb=_pick_mse_tile(b),
                            vmem_limit=vmem_limit)

        total = jnp.float32(0.0)
        loss_msg = {}
        if self.loss_mse_scale > 0:
            total = total + self.loss_mse_scale * mse
            loss_msg['loss_mse'] = mse                      # device scalar, no host sync
        if self.loss_at_teacher_scale > 0:
            lt = outputs['loss_at_teacher']
            total = total + self.loss_at_teacher_scale * lt
            loss_msg['loss_at_teacher'] = lt
        if self.loss_at_student_scale > 0:
            ls = outputs['loss_at_student']
            total = total + self.loss_at_student_scale * ls
            loss_msg['loss_at_student'] = ls
        if self.loss_contrastive_scale > 0:
            total = total + self.loss_contrastive_scale * cl
            loss_msg['loss_cl'] = cl
            loss_msg['temp'] = self.temp
        return total, loss_msg


# --------------------------------------------------------------------------
# plain-JAX reference (mirrors the torch module in f32)
# --------------------------------------------------------------------------
def _reference(temp, s, t):
    s = s.astype(jnp.float32)
    t = t.astype(jnp.float32)
    mse = jnp.mean((s - t) ** 2)
    temp = jnp.clip(temp, 0.001, 0.5)
    s_n = s / jnp.maximum(jnp.linalg.norm(s, axis=-1, keepdims=True), 1e-12)
    t_n = t / jnp.maximum(jnp.linalg.norm(t, axis=-1, keepdims=True), 1e-12)
    logits = s_n @ t_n.T / temp
    labels = jnp.arange(logits.shape[0])

    def ce(lg):
        return jnp.mean(jax.nn.logsumexp(lg, axis=-1)
                        - lg[jnp.arange(lg.shape[0]), labels])

    cl = 0.5 * (ce(logits) + ce(logits.T))
    return mse, cl


if __name__ == "__main__":
    key = jax.random.PRNGKey(0)
    ks = jax.random.split(key, 8)

    def check(name, got, want, atol, rtol):
        g, w = float(got), float(want)
        assert abs(g - w) <= atol + rtol * abs(w), (name, g, w)

    # ---- case 1: tiny single-tile, f32, MSE + contrastive ----
    B, D = 8, 32
    s1 = jax.random.normal(ks[0], (B, D), dtype=jnp.float32)
    t1 = jax.random.normal(ks[1], (B, D), dtype=jnp.float32)
    out1 = {'sentence_embedding': s1,
            'loss_at_teacher': jnp.float32(0.0),
            'loss_at_student': jnp.float32(0.0)}
    lm1 = LossManagerPallas(loss_mse_scale=1.0, loss_contrastive_scale=1.0)
    tot1, msg1 = lm1.forward(out1, t1)
    jax.block_until_ready(tot1)
    rm1, rc1 = _reference(lm1.temp, s1, t1)
    check("mse1", msg1['loss_mse'], rm1, 1e-5, 1e-5)
    check("cl1", msg1['loss_cl'], rc1, 2e-2, 2e-2)   # bf16 MXU path vs f32 reference
    check("tot1", tot1, rm1 + rc1, 3e-2, 2e-2)

    # ---- case 2: multi-tile grid + 2-way split + online column logsumexp ----
    B2, D2 = 32, 128
    s2 = jax.random.normal(ks[2], (B2, D2), dtype=jnp.float32)
    t2 = jax.random.normal(ks[3], (B2, D2), dtype=jnp.float32)
    out2 = {'sentence_embedding': s2,
            'loss_at_teacher': jnp.float32(0.0),
            'loss_at_student': jnp.float32(0.0)}
    lm2 = LossManagerPallas(loss_mse_scale=1.0, loss_contrastive_scale=1.0,
                            row_tile=8)    # 4 row tiles -> 2 splits x 2 tiles
    tot2, msg2 = lm2.forward(out2, t2)
    jax.block_until_ready(tot2)
    rm2, rc2 = _reference(lm2.temp, s2, t2)
    check("mse2", msg2['loss_mse'], rm2, 1e-5, 1e-5)
    check("cl2", msg2['loss_cl'], rc2, 2e-2, 2e-2)

    # ---- case 3: bf16 inputs exercise the bf16 fast path ----
    B3, D3 = 16, 64
    s3 = jax.random.normal(ks[4], (B3, D3), dtype=jnp.float32).astype(jnp.bfloat16)
    t3 = jax.random.normal(ks[5], (B3, D3), dtype=jnp.float32).astype(jnp.bfloat16)
    out3 = {'sentence_embedding': s3,
            'loss_at_teacher': jnp.float32(0.0),
            'loss_at_student': jnp.float32(0.0)}
    lm3 = LossManagerPallas(loss_mse_scale=1.0, loss_contrastive_scale=1.0,
                            row_tile=8)    # 2 row tiles -> 2 splits x 1 tile
    tot3, msg3 = lm3.forward(out3, t3)
    jax.block_until_ready(tot3)
    rm3, rc3 = _reference(lm3.temp, s3, t3)
    check("mse3", msg3['loss_mse'], rm3, 1e-4, 1e-4)
    check("cl3", msg3['loss_cl'], rc3, 3e-2, 3e-2)

    # ---- case 4: MSE-only specialization + scalar pass-through losses ----
    B4, D4 = 24, 32
    s4 = jax.random.normal(ks[6], (B4, D4), dtype=jnp.float32)
    t4 = jax.random.normal(ks[7], (B4, D4), dtype=jnp.float32)
    out4 = {'sentence_embedding': s4,
            'loss_at_teacher': jnp.float32(0.37),
            'loss_at_student': jnp.float32(0.11)}
    lm4 = LossManagerPallas(loss_mse_scale=1.0, loss_at_teacher_scale=0.5,
                            loss_at_student_scale=2.0, loss_contrastive_scale=0.0)
    tot4, msg4 = lm4.forward(out4, t4)
    jax.block_until_ready(tot4)
    rm4 = jnp.mean((s4 - t4) ** 2)
    check("mse4", msg4['loss_mse'], rm4, 1e-5, 1e-5)
    check("tot4", tot4, rm4 + 0.5 * 0.37 + 2.0 * 0.11, 1e-5, 1e-5)
    assert 'loss_cl' not in msg4

    print("KERNEL_OK")
</pallas_src>

<mosaic_0001>
module attributes {stable_mosaic.version = 11 : i64} {
  func.func @_cl_kernel(%arg0: i32, %arg1: i32, %arg2: memref<1xf32, #tpu.memory_space<smem>>, %arg3: memref<8x32xf32, #tpu.memory_space<vmem>>, %arg4: memref<8x32xbf16, #tpu.memory_space<any>>, %arg5: memref<8x32xf32, #tpu.memory_space<vmem>>, %arg6: memref<1x1x1xf32, #tpu.memory_space<vmem>>, %arg7: memref<1x1x1xf32, #tpu.memory_space<vmem>>, %arg8: memref<1x1x1xf32, #tpu.memory_space<vmem>>, %arg9: memref<1x1x8xf32, #tpu.memory_space<vmem>>, %arg10: memref<1x1x8xf32, #tpu.memory_space<vmem>>, %arg11: memref<8x32xbf16, #tpu.memory_space<vmem>>) attributes {dimension_semantics = [#tpu.dimension_semantics<parallel>, #tpu.dimension_semantics<arbitrary>], iteration_bounds = array<i64: 1, 1>, scalar_prefetch = 0 : i64, scratch_operands = 1 : i64, tpu.core_type = #tpu.core_type<tc>, window_params = [{transform_indices = @transform_0, window_bounds = array<i64: 1>}, {transform_indices = @transform_1, window_bounds = array<i64: 8, 32>}, {}, {transform_indices = @transform_3, window_bounds = array<i64: 8, 32>}, {transform_indices = @transform_4, window_bounds = array<i64: 1, 1, 1>}, {transform_indices = @transform_5, window_bounds = array<i64: 1, 1, 1>}, {transform_indices = @transform_6, window_bounds = array<i64: 1, 1, 1>}, {transform_indices = @transform_7, window_bounds = array<i64: 1, 1, 8>}, {transform_indices = @transform_8, window_bounds = array<i64: 1, 1, 8>}]} {
    %c0_i32 = arith.constant 0 : i32
    %0 = arith.cmpi eq, %arg1, %c0_i32 : i32
    %1 = arith.extui %0 : i1 to i32
    %c0_i32_0 = arith.constant 0 : i32
    %2 = arith.cmpi ne, %1, %c0_i32_0 : i32
    scf.if %2 {
      "tpu.region"() ({
        %97 = tpu.sem_alloc : memref<!tpu.dma_semaphore, #tpu.memory_space<semaphore_mem>>
        tpu.enqueue_dma source(%arg4 : memref<8x32xbf16, #tpu.memory_space<any>>) target(%arg11 : memref<8x32xbf16, #tpu.memory_space<vmem>>) target_semaphore(%97 : memref<!tpu.dma_semaphore, #tpu.memory_space<semaphore_mem>>)
        tpu.wait_dma2 semaphore(%97 : memref<!tpu.dma_semaphore, #tpu.memory_space<semaphore_mem>>) src(%arg4 : memref<8x32xbf16, #tpu.memory_space<any>>) dst(%arg11 : memref<8x32xbf16, #tpu.memory_space<vmem>>)
        tpu.yield
      }) : () -> ()
      %cst_48 = arith.constant 0.000000e+00 : f32
      %87 = vector.broadcast %cst_48 : f32 to vector<1x1x1xf32>
      %c0_49 = arith.constant 0 : index
      %c0_50 = arith.constant 0 : index
      %c0_51 = arith.constant 0 : index
      %88 = vector.load %arg6[%c0_49, %c0_50, %c0_51] : memref<1x1x1xf32, #tpu.memory_space<vmem>>, vector<1x1x1xf32>
      tpu.vector_store %arg6[%c0_49, %c0_50, %c0_51], %87 {strides = array<i32>} : memref<1x1x1xf32, #tpu.memory_space<vmem>>, vector<1x1x1xf32>,
      %cst_52 = arith.constant 0.000000e+00 : f32
      %89 = vector.broadcast %cst_52 : f32 to vector<1x1x1xf32>
      %c0_53 = arith.constant 0 : index
      %c0_54 = arith.constant 0 : index
      %c0_55 = arith.constant 0 : index
      %90 = vector.load %arg7[%c0_53, %c0_54, %c0_55] : memref<1x1x1xf32, #tpu.memory_space<vmem>>, vector<1x1x1xf32>
      tpu.vector_store %arg7[%c0_53, %c0_54, %c0_55], %89 {strides = array<i32>} : memref<1x1x1xf32, #tpu.memory_space<vmem>>, vector<1x1x1xf32>,
      %cst_56 = arith.constant 0.000000e+00 : f32
      %91 = vector.broadcast %cst_56 : f32 to vector<1x1x1xf32>
      %c0_57 = arith.constant 0 : index
      %c0_58 = arith.constant 0 : index
      %c0_59 = arith.constant 0 : index
      %92 = vector.load %arg8[%c0_57, %c0_58, %c0_59] : memref<1x1x1xf32, #tpu.memory_space<vmem>>, vector<1x1x1xf32>
      tpu.vector_store %arg8[%c0_57, %c0_58, %c0_59], %91 {strides = array<i32>} : memref<1x1x1xf32, #tpu.memory_space<vmem>>, vector<1x1x1xf32>,
      %cst_60 = arith.constant 0xFF800000 : f32
      %93 = vector.broadcast %cst_60 : f32 to vector<1x1x8xf32>
      %c0_61 = arith.constant 0 : index
      %c0_62 = arith.constant 0 : index
      %c0_63 = arith.constant 0 : index
      %94 = vector.load %arg9[%c0_61, %c0_62, %c0_63] : memref<1x1x8xf32, #tpu.memory_space<vmem>>, vector<1x1x8xf32>
      tpu.vector_store %arg9[%c0_61, %c0_62, %c0_63], %93 {strides = array<i32>} : memref<1x1x8xf32, #tpu.memory_space<vmem>>, vector<1x1x8xf32>,
      %cst_64 = arith.constant 0.000000e+00 : f32
      %95 = vector.broadcast %cst_64 : f32 to vector<1x1x8xf32>
      %c0_65 = arith.constant 0 : index
      %c0_66 = arith.constant 0 : index
      %c0_67 = arith.constant 0 : index
      %96 = vector.load %arg10[%c0_65, %c0_66, %c0_67] : memref<1x1x8xf32, #tpu.memory_space<vmem>>, vector<1x1x8xf32>
      tpu.vector_store %arg10[%c0_65, %c0_66, %c0_67], %95 {strides = array<i32>} : memref<1x1x8xf32, #tpu.memory_space<vmem>>, vector<1x1x8xf32>,
    } else {
    }
    %c0 = arith.constant 0 : index
    %3 = memref.load %arg2[%c0] : memref<1xf32, #tpu.memory_space<smem>>
    %c0_1 = arith.constant 0 : index
    %c0_2 = arith.constant 0 : index
    %4 = vector.load %arg3[%c0_1, %c0_2] : memref<8x32xf32, #tpu.memory_space<vmem>>, vector<8x32xf32>
    %c0_3 = arith.constant 0 : index
    %c0_4 = arith.constant 0 : index
    %5 = vector.load %arg5[%c0_3, %c0_4] : memref<8x32xf32, #tpu.memory_space<vmem>>, vector<8x32xf32>
    %6 = arith.subf %4, %5 : vector<8x32xf32>
    %c0_5 = arith.constant 0 : index
    %c0_6 = arith.constant 0 : index
    %c0_7 = arith.constant 0 : index
    %7 = vector.load %arg6[%c0_5, %c0_6, %c0_7] : memref<1x1x1xf32, #tpu.memory_space<vmem>>, vector<1x1x1xf32>
    %8 = arith.mulf %6, %6 : vector<8x32xf32>
    %9 = vector.shape_cast %8 : vector<8x32xf32> to vector<1x8x32xf32>
    %cst = arith.constant dense<0.000000e+00> : vector<1xf32>
    %10 = vector.multi_reduction <add>, %9, %cst [1, 2] : vector<1x8x32xf32> to vector<1xf32>
    %11 = vector.shape_cast %10 : vector<1xf32> to vector<1x1x1xf32>
    %12 = vector.extract %11[0, 0, 0] : f32 from vector<1x1x1xf32>
    %13 = vector.broadcast %12 : f32 to vector<1x1x1xf32>
    %14 = arith.addf %7, %13 : vector<1x1x1xf32>
    %c0_8 = arith.constant 0 : index
    %c0_9 = arith.constant 0 : index
    %c0_10 = arith.constant 0 : index
    %15 = vector.load %arg6[%c0_8, %c0_9, %c0_10] : memref<1x1x1xf32, #tpu.memory_space<vmem>>, vector<1x1x1xf32>
    tpu.vector_store %arg6[%c0_8, %c0_9, %c0_10], %14 {strides = array<i32>} : memref<1x1x1xf32, #tpu.memory_space<vmem>>, vector<1x1x1xf32>,
    %16 = arith.mulf %4, %4 : vector<8x32xf32>
    %cst_11 = arith.constant dense<0.000000e+00> : vector<8xf32>
    %17 = vector.multi_reduction <add>, %16, %cst_11 [1] : vector<8x32xf32> to vector<8xf32>
    %18 = vector.shape_cast %17 : vector<8xf32> to vector<8x1xf32>
    %cst_12 = arith.constant 1.000000e-24 : f32
    %19 = vector.broadcast %cst_12 : f32 to vector<8x1xf32>
    %20 = arith.maximumf %18, %19 : vector<8x1xf32>
    %21 = math.rsqrt %20 : vector<8x1xf32>
    %22 = vector.broadcast %21 : vector<8x1xf32> to vector<8x32xf32>
    %23 = arith.mulf %4, %22 : vector<8x32xf32>
    %c1_i32 = arith.constant 1 : i32
    %24 = arith.muli %arg0, %c1_i32 : i32
    %25 = arith.addi %24, %arg1 : i32
    %c8_i32 = arith.constant 8 : i32
    %26 = arith.muli %25, %c8_i32 : i32
    %27 = tpu.assume_multiple %26, 8 : i32
    %28 = arith.index_cast %27 : i32 to index
    %c0_13 = arith.constant 0 : index
    %29 = vector.load %arg11[%28, %c0_13] : memref<8x32xbf16, #tpu.memory_space<vmem>>, vector<8x32xbf16>
    %30 = arith.extf %29 : vector<8x32xbf16> to vector<8x32xf32>
    %31 = arith.mulf %23, %30 : vector<8x32xf32>
    %cst_14 = arith.constant dense<0.000000e+00> : vector<8xf32>
    %32 = vector.multi_reduction <add>, %31, %cst_14 [1] : vector<8x32xf32> to vector<8xf32>
    %33 = vector.shape_cast %32 : vector<8xf32> to vector<8x1xf32>
    %34 = vector.broadcast %3 : f32 to vector<8x1xf32>
    %35 = arith.mulf %34, %33 : vector<8x1xf32>
    %c0_15 = arith.constant 0 : index
    %c0_16 = arith.constant 0 : index
    %c0_17 = arith.constant 0 : index
    %36 = vector.load %arg8[%c0_15, %c0_16, %c0_17] : memref<1x1x1xf32, #tpu.memory_space<vmem>>, vector<1x1x1xf32>
    %37 = vector.shape_cast %35 : vector<8x1xf32> to vector<1x8x1xf32>
    %cst_18 = arith.constant dense<0.000000e+00> : vector<1xf32>
    %38 = vector.multi_reduction <add>, %37, %cst_18 [1, 2] : vector<1x8x1xf32> to vector<1xf32>
    %39 = vector.shape_cast %38 : vector<1xf32> to vector<1x1x1xf32>
    %40 = vector.extract %39[0, 0, 0] : f32 from vector<1x1x1xf32>
    %41 = vector.broadcast %40 : f32 to vector<1x1x1xf32>
    %42 = arith.addf %36, %41 : vector<1x1x1xf32>
    %c0_19 = arith.constant 0 : index
    %c0_20 = arith.constant 0 : index
    %c0_21 = arith.constant 0 : index
    %43 = vector.load %arg8[%c0_19, %c0_20, %c0_21] : memref<1x1x1xf32, #tpu.memory_space<vmem>>, vector<1x1x1xf32>
    tpu.vector_store %arg8[%c0_19, %c0_20, %c0_21], %42 {strides = array<i32>} : memref<1x1x1xf32, #tpu.memory_space<vmem>>, vector<1x1x1xf32>,
    %44 = arith.truncf %23 : vector<8x32xf32> to vector<8x32xbf16>
    %c0_22 = arith.constant 0 : index
    %c0_23 = arith.constant 0 : index
    %45 = vector.load %arg11[%c0_22, %c0_23] : memref<8x32xbf16, #tpu.memory_space<vmem>>, vector<8x32xbf16>
    %cst_24 = arith.constant dense<0.000000e+00> : vector<8x8xf32>
    %46 = tpu.matmul %44, %45, %cst_24 {dimension_numbers = #tpu.dot_dimension_numbers<[1], [1], [0], [0], [0, 0, 1, 0], [], []>} : vector<8x32xbf16>, vector<8x32xbf16>, vector<8x8xf32> -> vector<8x8xf32>
    %47 = vector.broadcast %3 : f32 to vector<8x8xf32>
    %48 = arith.mulf %47, %46 : vector<8x8xf32>
    %cst_25 = arith.constant dense<0xFF800000> : vector<8xf32>
    %49 = vector.multi_reduction <maximumf>, %48, %cst_25 [1] : vector<8x8xf32> to vector<8xf32>
    %50 = vector.shape_cast %49 : vector<8xf32> to vector<8x1xf32>
    %51 = vector.broadcast %50 : vector<8x1xf32> to vector<8x8xf32>
    %52 = arith.subf %48, %51 : vector<8x8xf32>
    %53 = math.exp %52 : vector<8x8xf32>
    %cst_26 = arith.constant dense<0.000000e+00> : vector<8xf32>
    %54 = vector.multi_reduction <add>, %53, %cst_26 [1] : vector<8x8xf32> to vector<8xf32>
    %55 = vector.shape_cast %54 : vector<8xf32> to vector<8x1xf32>
    %56 = math.log %55 : vector<8x1xf32>
    %57 = arith.addf %56, %50 : vector<8x1xf32>
    %c0_27 = arith.constant 0 : index
    %c0_28 = arith.constant 0 : index
    %c0_29 = arith.constant 0 : index
    %58 = vector.load %arg7[%c0_27, %c0_28, %c0_29] : memref<1x1x1xf32, #tpu.memory_space<vmem>>, vector<1x1x1xf32>
    %59 = arith.subf %57, %35 : vector<8x1xf32>
    %60 = vector.shape_cast %59 : vector<8x1xf32> to vector<1x8x1xf32>
    %cst_30 = arith.constant dense<0.000000e+00> : vector<1xf32>
    %61 = vector.multi_reduction <add>, %60, %cst_30 [1, 2] : vector<1x8x1xf32> to vector<1xf32>
    %62 = vector.shape_cast %61 : vector<1xf32> to vector<1x1x1xf32>
    %63 = vector.extract %62[0, 0, 0] : f32 from vector<1x1x1xf32>
    %64 = vector.broadcast %63 : f32 to vector<1x1x1xf32>
    %65 = arith.addf %58, %64 : vector<1x1x1xf32>
    %c0_31 = arith.constant 0 : index
    %c0_32 = arith.constant 0 : index
    %c0_33 = arith.constant 0 : index
    %66 = vector.load %arg7[%c0_31, %c0_32, %c0_33] : memref<1x1x1xf32, #tpu.memory_space<vmem>>, vector<1x1x1xf32>
    tpu.vector_store %arg7[%c0_31, %c0_32, %c0_33], %65 {strides = array<i32>} : memref<1x1x1xf32, #tpu.memory_space<vmem>>, vector<1x1x1xf32>,
    %c0_34 = arith.constant 0 : index
    %c0_35 = arith.constant 0 : index
    %c0_36 = arith.constant 0 : index
    %67 = vector.load %arg9[%c0_34, %c0_35, %c0_36] : memref<1x1x8xf32, #tpu.memory_space<vmem>>, vector<1x1x8xf32>
    %68 = vector.shape_cast %67 : vector<1x1x8xf32> to vector<1x8xf32>
    %c0_37 = arith.constant 0 : index
    %c0_38 = arith.constant 0 : index
    %c0_39 = arith.constant 0 : index
    %69 = vector.load %arg10[%c0_37, %c0_38, %c0_39] : memref<1x1x8xf32, #tpu.memory_space<vmem>>, vector<1x1x8xf32>
    %70 = vector.shape_cast %69 : vector<1x1x8xf32> to vector<1x8xf32>
    %cst_40 = arith.constant dense<0xFF800000> : vector<8xf32>
    %71 = vector.multi_reduction <maximumf>, %48, %cst_40 [0] : vector<8x8xf32> to vector<8xf32>
    %72 = vector.shape_cast %71 : vector<8xf32> to vector<1x8xf32>
    %73 = arith.maximumf %68, %72 : vector<1x8xf32>
    %74 = arith.subf %68, %73 : vector<1x8xf32>
    %75 = math.exp %74 : vector<1x8xf32>
    %76 = arith.mulf %70, %75 : vector<1x8xf32>
    %77 = vector.broadcast %73 : vector<1x8xf32> to vector<8x8xf32>
    %78 = arith.subf %48, %77 : vector<8x8xf32>
    %79 = math.exp %78 : vector<8x8xf32>
    %cst_41 = arith.constant dense<0.000000e+00> : vector<8xf32>
    %80 = vector.multi_reduction <add>, %79, %cst_41 [0] : vector<8x8xf32> to vector<8xf32>
    %81 = vector.shape_cast %80 : vector<8xf32> to vector<1x8xf32>
    %82 = arith.addf %76, %81 : vector<1x8xf32>
    %83 = vector.shape_cast %73 : vector<1x8xf32> to vector<1x1x8xf32>
    %c0_42 = arith.constant 0 : index
    %c0_43 = arith.constant 0 : index
    %c0_44 = arith.constant 0 : index
    %84 = vector.load %arg9[%c0_42, %c0_43, %c0_44] : memref<1x1x8xf32, #tpu.memory_space<vmem>>, vector<1x1x8xf32>
    tpu.vector_store %arg9[%c0_42, %c0_43, %c0_44], %83 {strides = array<i32>} : memref<1x1x8xf32, #tpu.memory_space<vmem>>, vector<1x1x8xf32>,
    %85 = vector.shape_cast %82 : vector<1x8xf32> to vector<1x1x8xf32>
    %c0_45 = arith.constant 0 : index
    %c0_46 = arith.constant 0 : index
    %c0_47 = arith.constant 0 : index
    %86 = vector.load %arg10[%c0_45, %c0_46, %c0_47] : memref<1x1x8xf32, #tpu.memory_space<vmem>>, vector<1x1x8xf32>
    tpu.vector_store %arg10[%c0_45, %c0_46, %c0_47], %85 {strides = array<i32>} : memref<1x1x8xf32, #tpu.memory_space<vmem>>, vector<1x1x8xf32>,
    return
  }
  func.func @transform_0(%arg0: i32, %arg1: i32) -> i32 {
    %c0_i32 = arith.constant 0 : i32
    %c0_i32_0 = arith.constant 0 : i32
    return %c0_i32 : i32
  }
  func.func @transform_1(%arg0: i32, %arg1: i32) -> (i32, i32) {
    %c1_i32 = arith.constant 1 : i32
    %0 = arith.muli %arg0, %c1_i32 : i32
    %1 = arith.addi %0, %arg1 : i32
    %c0_i32 = arith.constant 0 : i32
    %c0_i32_0 = arith.constant 0 : i32
    return %1, %c0_i32 : i32, i32
  }
  func.func @transform_3(%arg0: i32, %arg1: i32) -> (i32, i32) {
    %c1_i32 = arith.constant 1 : i32
    %0 = arith.muli %arg0, %c1_i32 : i32
    %1 = arith.addi %0, %arg1 : i32
    %c0_i32 = arith.constant 0 : i32
    %c0_i32_0 = arith.constant 0 : i32
    return %1, %c0_i32 : i32, i32
  }
  func.func @transform_4(%arg0: i32, %arg1: i32) -> (i32, i32, i32) {
    %c0_i32 = arith.constant 0 : i32
    %c0_i32_0 = arith.constant 0 : i32
    %c0_i32_1 = arith.constant 0 : i32
    return %arg0, %c0_i32, %c0_i32_0 : i32, i32, i32
  }
  func.func @transform_5(%arg0: i32, %arg1: i32) -> (i32, i32, i32) {
    %c0_i32 = arith.constant 0 : i32
    %c0_i32_0 = arith.constant 0 : i32
    %c0_i32_1 = arith.constant 0 : i32
    return %arg0, %c0_i32, %c0_i32_0 : i32, i32, i32
  }
  func.func @transform_6(%arg0: i32, %arg1: i32) -> (i32, i32, i32) {
    %c0_i32 = arith.constant 0 : i32
    %c0_i32_0 = arith.constant 0 : i32
    %c0_i32_1 = arith.constant 0 : i32
    return %arg0, %c0_i32, %c0_i32_0 : i32, i32, i32
  }
  func.func @transform_7(%arg0: i32, %arg1: i32) -> (i32, i32, i32) {
    %c0_i32 = arith.constant 0 : i32
    %c0_i32_0 = arith.constant 0 : i32
    %c0_i32_1 = arith.constant 0 : i32
    return %arg0, %c0_i32, %c0_i32_0 : i32, i32, i32
  }
  func.func @transform_8(%arg0: i32, %arg1: i32) -> (i32, i32, i32) {
    %c0_i32 = arith.constant 0 : i32
    %c0_i32_0 = arith.constant 0 : i32
    %c0_i32_1 = arith.constant 0 : i32
    return %arg0, %c0_i32, %c0_i32_0 : i32, i32, i32
  }
}

</mosaic_0001>

<llo_original>
// kernel: _cl_call.1
$region0: #{_cl_call.1}
  #allocation0 [shape = 'u32[]', space=smem, size = 0x4, offset = 0x4, fixed_abs, tag = 'smem constant byte address 0x4 - core index']
  #allocation1 [shape = 'u32[144,128]{1,0:T(1,128)}', space=vmem, size = 0x12000, scoped, tag = 'internal scratch']
  #allocation2 [shape = 'bf16[8,32]{1,0:T(8,128)(2,1)}', space=vmem, size = 0x800, scoped, tag = 'scratch operand']
  #allocation3 [shape = 'f32[1]{0:T(128)S(6)}', space=smem, size = 0x200, scoped, tag = 'scoped memory for _cl_call.1']
  #allocation10 [shape = 's32[]', space=sflag, size = 0x4, offset = 0, fixed_abs, tag = 'sflag constant byte address 0x0 - dummy sync flag']
  %s0 = inlined_call_operand.<no memory space> [shape: f32[1], index: 0, kind: input, shape index: {}]
  %s1 = inlined_call_operand.vmem [shape: f32[8,32], index: 1, kind: input, shape index: {}]
  %s2 = inlined_call_operand.vmem [shape: bf16[8,32], index: 2, kind: input, shape index: {}]
  %s3 = inlined_call_operand.vmem [shape: f32[8,32], index: 3, kind: input, shape index: {}]
  %s4 = inlined_call_operand.hbm [shape: f32[1,1,1], index: 4, kind: output, shape index: {0}]
  %s5 = inlined_call_operand.hbm [shape: f32[1,1,1], index: 5, kind: output, shape index: {1}]
  %s6 = inlined_call_operand.hbm [shape: f32[1,1,1], index: 6, kind: output, shape index: {2}]
  %s7 = inlined_call_operand.vmem [shape: f32[1,1,8], index: 7, kind: output, shape index: {3}]
  %s8 = inlined_call_operand.vmem [shape: f32[1,1,8], index: 8, kind: output, shape index: {4}]
  %9 = xla_tuple %s4, %s5, %s6, %s7, %s8
  %s10 = sld [smem:[#allocation0]]
  $region89: #{_cl_call.1} parent=0
    _
  %s12 = ssub.s32 1, %s10
  %s13 = scalar_select 0, %s12, %s10
  %14 = sst [smem:[#allocation3]] %s0
  $region1: #{_cl_call.1} parent=0
    #allocation4 [shape = 'u8[512]{0}', space=vmem, size = 0x400, scoped, tag = 'output window, operand 0, single buffered']
    #allocation5 [shape = 's32[1]{0}', space=sflag, size = 0x4, scoped, tag = 'scoped memory for _cl_call.1']
    #allocation6 [shape = 'u8[512]{0}', space=vmem, size = 0x400, scoped, tag = 'output window, operand 1, single buffered']
    #allocation7 [shape = 's32[1]{0}', space=sflag, size = 0x4, scoped, tag = 'scoped memory for _cl_call.1']
    #allocation8 [shape = 'u8[512]{0}', space=vmem, size = 0x400, scoped, tag = 'output window, operand 2, single buffered']
    %15 = vsyncpa [#allocation5], 0
    %16 = vsyncpa [#allocation7], 0
    // Predicated region
    $region2: #{_cl_call.1} parent=1 // pred_check
      _
    $region3: #{_cl_call.1} parent=1 // pred_check_branch
      %18 = sbr.rel (0) target = $region5
    $region4: #{_cl_call.1} parent=1 // pred_region
      _
    $region5: #{_cl_call.1} parent=1 // pred_fallthru
      _
    // Predicated region
    $region6: #{_cl_call.1} parent=1 // pred_check
      _
    $region7: #{_cl_call.1} parent=1 // pred_check_branch
      %20 = sbr.rel (0) target = $region9
    $region8: #{_cl_call.1} parent=1 // pred_region
      %s21 = sadd.s32 0, 0
      %p22 = scmp.lt.s32.totalorder %s21, 0
      %s23 = scalar_select %p22, %s21, 0
      %s24 = smul.addr %s23, 8
      %s25 = scalar_lea.vmem %s1, %s24
      %s26 = sadd.s32 0, 0
    $region9: #{_cl_call.1} parent=1 // pred_fallthru
      _
    // Predicated region
    $region10: #{_cl_call.1} parent=1 // pred_check
      _
    $region11: #{_cl_call.1} parent=1 // pred_check_branch
      %28 = sbr.rel (0) target = $region13
    $region12: #{_cl_call.1} parent=1 // pred_region
      %s29 = sadd.s32 0, 0
      %p30 = scmp.lt.s32.totalorder %s29, 0
      %s31 = scalar_select %p30, %s29, 0
      %s32 = smul.addr %s31, 8
      %s33 = scalar_lea.vmem %s3, %s32
      %s34 = sadd.s32 0, 0
    $region13: #{_cl_call.1} parent=1 // pred_fallthru
      _
    %s35 = sadd.s32 0, 0
    %p36 = scmp.lt.s32.totalorder %s35, 0
    %s37 = scalar_select %p36, %s35, 0
    %s38 = smul.addr %s37, 8
    %s39 = scalar_lea.vmem %s1, %s38
    %s40 = sadd.s32 0, 0
    %p41 = scmp.lt.s32.totalorder %s40, 0
    %s42 = scalar_select %p41, %s40, 0
    %s43 = smul.addr %s42, 8
    %s44 = scalar_lea.vmem %s3, %s43
    %s45 = sadd.s32 0, 0
    %p46 = scmp.lt.s32.totalorder %s45, 0
    %s47 = scalar_select %p46, %s45, 0
    %s48 = smul.addr %s47, 8
    %s49 = scalar_lea.vmem %s1, %s48
    %s50 = sadd.s32 0, 0
    %s51 = sadd.s32 0, 0
    %p52 = scmp.lt.s32.totalorder %s51, 0
    %s53 = scalar_select %p52, %s51, 0
    %s54 = smul.addr %s53, 8
    %s55 = scalar_lea.vmem %s3, %s54
    %s56 = sadd.s32 0, 0
    %p58 = scmp.eq.s32.totalorder 0, 0
    // Predicated region
    $region14: #{_cl_call.1} parent=1 // pred_check
      %p59 = pneg %p58
    $region15: #{_cl_call.1} parent=1 // pred_check_branch
      %61 = sbr.rel (%p59) target = $region17
    $region16: #{_cl_call.1} parent=1 // pred_region
      $region18: #{_cl_call.1} parent=16
        #allocation9 [shape = 's32[1]{0}', space=sflag, size = 0x4, scoped, tag = 'scoped memory for _cl_call.1']
        %p63 = scmp.lt.u32.totalorder 4, 8
        %p64 = pneg %p63
        // Predicated region
        $region19: #{_cl_call.1} parent=18 // pred_check
          _
        $region20: #{_cl_call.1} parent=18 // pred_check_branch
          %66 = sbr.rel (%p63) target = $region22
        $region21: #{_cl_call.1} parent=18 // pred_region
          %s82 = sand.u32 4, 7
          %p83 = scmp.eq.s32.totalorder %s82, 0
          %p84 = pneg %p83
          // Predicated region
          $region34: #{_cl_call.1} parent=21 // pred_check
            _
          $region35: #{_cl_call.1} parent=21 // pred_check_branch
            %86 = sbr.rel (%p83) target = $region37
          $region36: #{_cl_call.1} parent=21 // pred_region
            %s87 = sand.u32 4, 7
            %s88 = ssub.s32 4, %s87
            %s89 = scalar_lea.vmem %s2, %s88
            %s90 = ssub.s32 4, %s87
            %s91 = scalar_lea.vmem [#allocation2], %s90
            %s92 = sshll.u32 1, %s87
            %s93 = ssub.s32 %s92, 1
            loop: start=0, step=1, limit=1
            $region38: #{_cl_call.1} parent=36 // loop_pre_header
              _
            $region39: #{_cl_call.1} parent=36 // loop_header
              %s95 = sphi 0, %s99
              %p96 = scmp.ge.s32.totalorder %s95, 1
              %s100 = sphi %s89, %s89
              %s101 = sphi %s91, %s91
            $region40: #{_cl_call.1} parent=36 // loop_header_branch
              %98 = sbr.rel (%p96) target = $region44
            $region41: #{_cl_call.1} parent=36 // loop_body
              %v102 = vld [vmem:[%s100] sm:%s93]
              %103 = vst [vmem:[%s101] sm:%s93] %v102
            $region42: #{_cl_call.1} parent=36 // loop_footer
              %s99 = sadd.s32 1, %s95
            $region43: #{_cl_call.1} parent=36 // loop_footer_branch
              %94 = sbr.rel target = $region39
            $region44: #{_cl_call.1} parent=36 // loop_exit
              _
          $region37: #{_cl_call.1} parent=21 // pred_fallthru
            _
        $region22: #{_cl_call.1} parent=18 // pred_fallthru
          _
        // Predicated region
        $region23: #{_cl_call.1} parent=18 // pred_check
          %p67 = pneg %p63
        $region24: #{_cl_call.1} parent=18 // pred_check_branch
          %69 = sbr.rel (%p67) target = $region26
        $region25: #{_cl_call.1} parent=18 // pred_region
          %s70 = sshll.u32 1, 4
          %s71 = ssub.s32 %s70, 1
          loop: start=0, step=1, limit=1
          $region27: #{_cl_call.1} parent=25 // loop_pre_header
            _
          $region28: #{_cl_call.1} parent=25 // loop_header
            %s73 = sphi 0, %s77
            %p74 = scmp.ge.s32.totalorder %s73, 1
            %s78 = sphi %s2, %s2
            %s79 = sphi [#allocation2], [#allocation2]
          $region29: #{_cl_call.1} parent=25 // loop_header_branch
            %76 = sbr.rel (%p74) target = $region33
          $region30: #{_cl_call.1} parent=25 // loop_body
            %v80 = vld [vmem:[%s78] sm:%s71]
            %81 = vst [vmem:[%s79] sm:%s71] %v80
          $region31: #{_cl_call.1} parent=25 // loop_footer
            %s77 = sadd.s32 1, %s73
          $region32: #{_cl_call.1} parent=25 // loop_footer_branch
            %72 = sbr.rel target = $region28
          $region33: #{_cl_call.1} parent=25 // loop_exit
            _
        $region26: #{_cl_call.1} parent=18 // pred_fallthru
          _
        // Predicated region
        $region45: #{_cl_call.1} parent=18 // pred_check
          _
        $region46: #{_cl_call.1} parent=18 // pred_check_branch
          %106 = sbr.rel (0) target = $region48
        $region47: #{_cl_call.1} parent=18 // pred_region
          %107 = vsyncadd [#allocation9], 64
        $region48: #{_cl_call.1} parent=18 // pred_fallthru
          _
        %s108 = smul.u32 4, 1
        %s109 = smul.u32 %s108, 1
        %s110 = sshll.u32 %s109, 4
        %111 = dma.done [#allocation9], %s110
      %vm112 = vcmask 0
      %113 = vst.msk [vmem:[#allocation4] sm:$0x1] %vm112, 0.0
      %114 = vst.msk [vmem:[#allocation6] sm:$0x1] %vm112, 0.0
      %115 = vst.msk [vmem:[#allocation8] sm:$0x1] %vm112, 0.0
      %vm116 = vcmask 57344
      %117 = vst.msk [vmem:[%s7] sm:$0x1] %vm116, -inf
      %118 = vst.msk [vmem:[%s8] sm:$0x1] %vm116, 0.0
    $region17: #{_cl_call.1} parent=1 // pred_fallthru
      _
    %s119 = sld [smem:[#allocation3]]
    %v120 = vld [vmem:[%s49] sm:$0xff]
    %v121 = vld [vmem:[%s55] sm:$0xff]
    %v122 = vsub.f32 %v120, %v121
    %v123 = vld [vmem:[#allocation4] sm:$0x1]
    %v124 = vmul.f32 %v122, %v122
    %vm125 = vcmask 261120
    %v126 = vsel %vm125, %v124, 0.0
    %127 = vadd.xlane.f32.xlu0 %v126
    %v128 = vpop.xlane.xlu0 %127
    %v129 = vrot.slane %v128, 4
    %v130 = vadd.f32 %v128, %v129
    %v131 = vrot.slane %v130, 2
    %v132 = vadd.f32 %v130, %v131
    %v133 = vrot.slane %v132, 1
    %v134 = vadd.f32 %v132, %v133
    %s135 = vtos %v134
    %v136 = vstv %s135
    %v137 = vadd.f32 %v123, %v136
    %vm138 = vcmask 0
    %139 = vst.msk [vmem:[#allocation4] sm:$0x1] %vm138, %v137
    %v140 = vmul.f32 %v120, %v120
    %v141 = vsel %vm125, %v140, 0.0
    %142 = vadd.xlane.f32.xlu0 %v141
    %v143 = vpop.xlane.xlu0 %142
    %v144 = vmax.f32 %v143, 1e-24
    %v145 = vrsqrt.pop %v144
    %v146 = vmul.f32 %v120, %v145
    %s147 = sadd.s32 0, 0
    %s148 = smul.u32 %s147, 8
    %s149 = sshra.s32 %s148, 3
    %s150 = sand.u32 %s148, 7
    %s151 = smul.addr %s149, 4
    %s152 = scalar_lea.vmem [#allocation2], %s151
    %v153 = vld [vmem:[%s152] sm:$0xf]
    %v154 = vunpack.c.l.bf16 %v153
    %v155 = vmul.f32 %v146, %v154
    %v156 = vsel %vm125, %v155, 0.0
    %157 = vadd.xlane.f32.xlu0 %v156
    %v158 = vpop.xlane.xlu0 %157
    %v159 = vstv %s119
    %v160 = vmul.f32 %v159, %v158
    %v161 = vld [vmem:[#allocation8] sm:$0x1]
    %vm162 = vcmask 7168
    %v163 = vsel %vm162, %v160, 0.0
    %164 = vadd.xlane.f32.xlu0 %v163
    %v165 = vpop.xlane.xlu0 %164
    %v166 = vrot.slane %v165, 4
    %v167 = vadd.f32 %v165, %v166
    %v168 = vrot.slane %v167, 2
    %v169 = vadd.f32 %v167, %v168
    %v170 = vrot.slane %v169, 1
    %v171 = vadd.f32 %v169, %v170
    %s172 = vtos %v171
    %v173 = vstv %s172
    %v174 = vadd.f32 %v161, %v173
    %175 = vst.msk [vmem:[#allocation8] sm:$0x1] %vm138, %v174
    %v176 = vpack.c.bf16 %v146, %v146
    %v177 = vld [vmem:[#allocation2] sm:$0xf]
    %v179 = vsel %vm125, %v176, 0
    %v182 = vsel %vm125, %v177, 0
    %184 = vmatprep.subr.bf16.mxu0 0
    %185 = vmatpush1.bf16.xpose.msra.mxu0 0
    %186 = vmatprep.subr.bf16.mxu0 0
    %187 = vmatpush1.bf16.xpose.msra.mxu0 0
    %188 = vmatprep.subr.bf16.mxu0 0
    %189 = vmatpush1.bf16.xpose.msra.mxu0 0
    %190 = vmatprep.subr.bf16.mxu0 0
    %191 = vmatpush1.bf16.xpose.msra.mxu0 0
    %192 = vmatprep.subr.bf16.mxu0 0
    %193 = vmatpush1.bf16.xpose.msra.mxu0 0
    %194 = vmatprep.subr.bf16.mxu0 0
    %195 = vmatpush1.bf16.xpose.msra.mxu0 0
    %196 = vmatprep.subr.bf16.mxu0 0
    %197 = vmatpush1.bf16.xpose.msra.mxu0 0
    %198 = vmatprep.subr.bf16.mxu0 0
    %199 = vmatpush1.bf16.xpose.msra.mxu0 %v182
    %200 = vmatprep.subr.bf16.mxu0 0
    %201 = vmatpush2.bf16.xpose.msra.mxu0 0
    %202 = vmatprep.subr.bf16.mxu0 0
    %203 = vmatpush2.bf16.xpose.msra.mxu0 0
    %204 = vmatprep.subr.bf16.mxu0 0
    %205 = vmatpush2.bf16.xpose.msra.mxu0 0
    %206 = vmatprep.subr.bf16.mxu0 0
    %207 = vmatpush2.bf16.xpose.msra.mxu0 0
    %208 = vmatprep.subr.bf16.mxu0 0
    %209 = vmatpush2.bf16.xpose.msra.mxu0 0
    %210 = vmatprep.subr.bf16.mxu0 0
    %211 = vmatpush2.bf16.xpose.msra.mxu0 0
    %212 = vmatprep.subr.bf16.mxu0 0
    %213 = vmatpush2.bf16.xpose.msra.mxu0 0
    %214 = vmatprep.subr.bf16.mxu0 0
    %215 = vmatpush2.bf16.xpose.msra.mxu0 0
    %216 = vmatprep.mubr.bf16.mxu0 0
    %217 = vmatmul.mubr.bf16.gmra.mxu0 %v179
    %v218 = vpop.f32.mrf.mxu0
    %v219 = vadd.f32 0.0, %v218
    %v220 = vpop.f32.mrf.mxu0
    %v221 = vpop.f32.mrf.mxu0
    %v222 = vpop.f32.mrf.mxu0
    %223 = vdwg.mxu0
    %v224 = vmul.f32 %v159, %v219
    %vm225 = vcmask 64512
    %v226 = vsel %vm225, %v224, -inf
    %227 = vmax.xlane.f32.xlu0 %v226
    %v228 = vpop.xlane.xlu0 %227
    %v229 = vsub.f32 %v224, %v228
    %v230 = vmul.f32 %v229, 1.442695
    %v231 = vpow.pop %v230
    %v232 = vsel %vm225, %v231, 0.0
    %233 = vadd.xlane.f32.xlu0 %v232
    %v234 = vpop.xlane.xlu0 %233
    %v235 = vlog2.pop %v234
    %v236 = vmul.f32 %v235, 0.6931472
    %v237 = vadd.f32 %v236, %v228
    %v238 = vld [vmem:[#allocation6] sm:$0x1]
    %v239 = vsub.f32 %v237, %v160
    %v240 = vsel %vm162, %v239, 0.0
    %241 = vadd.xlane.f32.xlu0 %v240
    %v242 = vpop.xlane.xlu0 %241
    %v243 = vrot.slane %v242, 4
    %v244 = vadd.f32 %v242, %v243
    %v245 = vrot.slane %v244, 2
    %v246 = vadd.f32 %v244, %v245
    %v247 = vrot.slane %v246, 1
    %v248 = vadd.f32 %v246, %v247
    %s249 = vtos %v248
    %v250 = vstv %s249
    %v251 = vadd.f32 %v238, %v250
    %252 = vst.msk [vmem:[#allocation6] sm:$0x1] %vm138, %v251
    %v253 = vld [vmem:[%s7] sm:$0x1]
    %v254 = vld [vmem:[%s8] sm:$0x1]
    %v255 = vrot.slane %v226, 4
    %v256 = vmax.f32 %v226, %v255
    %v257 = vrot.slane %v256, 2
    %v258 = vmax.f32 %v256, %v257
    %v259 = vrot.slane %v258, 1
    %v260 = vmax.f32 %v258, %v259
    %v261 = vmax.f32 %v253, %v260
    %v262 = vsub.f32 %v253, %v261
    %v263 = vmul.f32 %v262, 1.442695
    %v264 = vpow.pop %v263
    %v265 = vmul.f32 %v254, %v264
    %v267 = vlaneseq
    %v268 = vshrl.u32 %v267, 7
    %v269 = vsub.s32 0, %v268
    %v270 = vrot.slane %v261, %v269
    %v272 = vsub.f32 %v224, %v270
    %v273 = vmul.f32 %v272, 1.442695
    %v274 = vpow.pop %v273
    %v275 = vsel %vm225, %v274, 0.0
    %v276 = vrot.slane %v275, 4
    %v277 = vadd.f32 %v275, %v276
    %v278 = vrot.slane %v277, 2
    %v279 = vadd.f32 %v277, %v278
    %v280 = vrot.slane %v279, 1
    %v281 = vadd.f32 %v279, %v280
    %v282 = vadd.f32 %v265, %v281
    %vm283 = vcmask 57344
    %284 = vst.msk [vmem:[%s7] sm:$0x1] %vm283, %v261
    %285 = vst.msk [vmem:[%s8] sm:$0x1] %vm283, %v282
    // Predicated region
    $region49: #{_cl_call.1} parent=1 // pred_check
      _
    $region50: #{_cl_call.1} parent=1 // pred_check_branch
      %287 = sbr.rel (0) target = $region52
    $region51: #{_cl_call.1} parent=1 // pred_region
      %s289 = ssub.s32 16, 16
      %290 = vsyncadd [#allocation5], %s289
      %s292 = sshll.u32 [#allocation4], 4
      %s293 = int_to_ptr.vmem [resolvable:$true] %s292
      %295 = dma.vmem_to_hbm [thread:$0]  %s293, 16, %s4, [#allocation5]
    $region52: #{_cl_call.1} parent=1 // pred_fallthru
      _
    // Predicated region
    $region53: #{_cl_call.1} parent=1 // pred_check
      _
    $region54: #{_cl_call.1} parent=1 // pred_check_branch
      %297 = sbr.rel (0) target = $region56
    $region55: #{_cl_call.1} parent=1 // pred_region
      %s299 = ssub.s32 16, 16
      %300 = vsyncadd [#allocation7], %s299
      %s302 = sshll.u32 [#allocation6], 4
      %s303 = int_to_ptr.vmem [resolvable:$true] %s302
      %305 = dma.vmem_to_hbm [thread:$0]  %s303, 16, %s5, [#allocation7]
    $region56: #{_cl_call.1} parent=1 // pred_fallthru
      _
    // Predicated region
    $region57: #{_cl_call.1} parent=1 // pred_check
      _
    $region58: #{_cl_call.1} parent=1 // pred_check_branch
      %307 = sbr.rel (0) target = $region60
    $region59: #{_cl_call.1} parent=1 // pred_region
      %s309 = ssub.s32 16, 16
      %310 = vsyncadd [#allocation7], %s309
      %s312 = sshll.u32 [#allocation8], 4
      %s313 = int_to_ptr.vmem [resolvable:$true] %s312
      %315 = dma.vmem_to_hbm [thread:$0]  %s313, 16, %s6, [#allocation7]
    $region60: #{_cl_call.1} parent=1 // pred_fallthru
      _
    // Predicated region
    $region61: #{_cl_call.1} parent=1 // pred_check
      _
    $region62: #{_cl_call.1} parent=1 // pred_check_branch
      %317 = sbr.rel (0) target = $region64
    $region63: #{_cl_call.1} parent=1 // pred_region
      _
    $region64: #{_cl_call.1} parent=1 // pred_fallthru
      _
    // Predicated region
    $region65: #{_cl_call.1} parent=1 // pred_check
      _
    $region66: #{_cl_call.1} parent=1 // pred_check_branch
      %319 = sbr.rel (0) target = $region68
    $region67: #{_cl_call.1} parent=1 // pred_region
      _
    $region68: #{_cl_call.1} parent=1 // pred_fallthru
      _
    // Predicated region
    $region69: #{_cl_call.1} parent=1 // pred_check
      _
    $region70: #{_cl_call.1} parent=1 // pred_check_branch
      %321 = sbr.rel (0) target = $region72
    $region71: #{_cl_call.1} parent=1 // pred_region
      %322 = dma.done [#allocation5], 16
    $region72: #{_cl_call.1} parent=1 // pred_fallthru
      _
    // Predicated region
    $region73: #{_cl_call.1} parent=1 // pred_check
      _
    $region74: #{_cl_call.1} parent=1 // pred_check_branch
      %324 = sbr.rel (0) target = $region76
    $region75: #{_cl_call.1} parent=1 // pred_region
      %325 = dma.done [#allocation7], 16
    $region76: #{_cl_call.1} parent=1 // pred_fallthru
      _
    // Predicated region
    $region77: #{_cl_call.1} parent=1 // pred_check
      _
    $region78: #{_cl_call.1} parent=1 // pred_check_branch
      %327 = sbr.rel (0) target = $region80
    $region79: #{_cl_call.1} parent=1 // pred_region
      %328 = dma.done [#allocation7], 16
    $region80: #{_cl_call.1} parent=1 // pred_fallthru
      _
    // Predicated region
    $region81: #{_cl_call.1} parent=1 // pred_check
      _
    $region82: #{_cl_call.1} parent=1 // pred_check_branch
      %330 = sbr.rel (0) target = $region84
    $region83: #{_cl_call.1} parent=1 // pred_region
      _
    $region84: #{_cl_call.1} parent=1 // pred_fallthru
      _
    // Predicated region
    $region85: #{_cl_call.1} parent=1 // pred_check
      _
    $region86: #{_cl_call.1} parent=1 // pred_check_branch
      %332 = sbr.rel (0) target = $region88
    $region87: #{_cl_call.1} parent=1 // pred_region
      _
    $region88: #{_cl_call.1} parent=1 // pred_fallthru
      _
    %333 = vsyncpa [#allocation5], 1
    %334 = vsyncpa [#allocation7], 1

</llo_original>
